<compile_context>
chip_gen: v7x
topology: tpu7x:2x2x1
jax: 0.10.0
libtpu: 0.0.40
codegen_flags: <defaults>
</compile_context>

<pallas_src>
import functools

import jax
import jax.numpy as jnp
from jax import lax
from jax.experimental import pallas as pl
from jax.experimental.pallas import tpu as pltpu

BN_EPS = 1e-5


def _conv_stats_kernel(x_ref, w_ref, y_ref, s1_ref, s2_ref, *, K, L_out):
    # x_ref : (1, C_in, L_pad)   one padded batch row (resident for this step)
    # w_ref : (K, C_out, C_in)   conv weight, tap-major (whole array, resident)
    # y_ref : (1, C_out, L_out)  conv output tile for this batch
    # s1/s2 : (C_out, 1)         per-channel sum / sum-of-squares accumulators
    @pl.when(pl.program_id(0) == 0)
    def _init():
        s1_ref[...] = jnp.zeros_like(s1_ref)
        s2_ref[...] = jnp.zeros_like(s2_ref)

    C_out = w_ref.shape[1]
    acc = jnp.zeros((C_out, L_out), jnp.float32)
    # K accumulated GEMMs with static tap offsets == one (C_out, C_in*K) GEMM,
    # but without building the im2col patch matrix.
    for k in range(K):
        x_k = x_ref[0, :, k:k + L_out].astype(jnp.float32)        # (C_in, L_out)
        acc += jnp.dot(w_ref[k].astype(jnp.float32), x_k,
                       preferred_element_type=jnp.float32)

    y_ref[...] = acc[None].astype(y_ref.dtype)
    s1_ref[...] += jnp.sum(acc, axis=1, keepdims=True)
    s2_ref[...] += jnp.sum(acc * acc, axis=1, keepdims=True)


def _bn_apply_kernel(y_ref, s1_ref, s2_ref, gamma_ref, beta_ref, o_ref, *,
                     inv_count):
    # Fold stats + affine into per-channel scale/shift (tiny (C_out,1) work),
    # then a single multiply-add per element.
    mean = s1_ref[...] * inv_count                      # (C_out, 1)
    var = s2_ref[...] * inv_count - mean * mean         # biased batch variance
    inv = lax.rsqrt(var + BN_EPS)
    scale = gamma_ref[...] * inv                        # (C_out, 1)
    shift = beta_ref[...] - mean * scale
    o_ref[...] = (y_ref[...].astype(jnp.float32) * scale + shift).astype(o_ref.dtype)


def conv_task_forward(x, weight, gamma, beta, *, stride=1, padding=None):
    """x: (N, C_in, L), weight: (C_out, C_in, K), gamma/beta: (C_out,)."""
    N, C_in, L = x.shape
    C_out, C_in_w, K = weight.shape
    assert C_in_w == C_in
    if padding is None:
        padding = K // 2
    assert stride == 1, "conv_task default stride=1 is what this kernel implements"

    L_pad = L + 2 * padding
    L_out = L_pad - K + 1

    # Layout plumbing only (no K-fold im2col copy).
    x_pad = jnp.pad(x, ((0, 0), (0, 0), (padding, padding)))       # (N, C_in, L_pad)
    w_t = jnp.transpose(weight, (2, 0, 1))                         # (K, C_out, C_in)
    gamma2 = gamma.reshape(C_out, 1).astype(jnp.float32)
    beta2 = beta.reshape(C_out, 1).astype(jnp.float32)

    vmem_limit = 32 * 1024 * 1024   # safe on v5e/v6e (128 MiB) and v7x (64 MiB)

    # ---- Pass 1: conv + per-channel stats accumulation (sequential over batch) ----
    y, s1, s2 = pl.pallas_call(
        functools.partial(_conv_stats_kernel, K=K, L_out=L_out),
        grid=(N,),
        in_specs=[
            pl.BlockSpec((1, C_in, L_pad), lambda n: (n, 0, 0)),
            pl.BlockSpec((K, C_out, C_in), lambda n: (0, 0, 0)),
        ],
        out_specs=(
            pl.BlockSpec((1, C_out, L_out), lambda n: (n, 0, 0)),
            pl.BlockSpec((C_out, 1), lambda n: (0, 0)),
            pl.BlockSpec((C_out, 1), lambda n: (0, 0)),
        ),
        out_shape=(
            jax.ShapeDtypeStruct((N, C_out, L_out), jnp.float32),
            jax.ShapeDtypeStruct((C_out, 1), jnp.float32),
            jax.ShapeDtypeStruct((C_out, 1), jnp.float32),
        ),
        compiler_params=pltpu.CompilerParams(
            dimension_semantics=("arbitrary",),   # stats accumulate across the grid
            vmem_limit_bytes=vmem_limit,
        ),
    )(x_pad, w_t)

    # ---- Pass 2: normalize + affine (parallel over batch, megacore-shardable) ----
    inv_count = 1.0 / float(N * L_out)
    out = pl.pallas_call(
        functools.partial(_bn_apply_kernel, inv_count=inv_count),
        grid=(N,),
        in_specs=[
            pl.BlockSpec((1, C_out, L_out), lambda n: (n, 0, 0)),
            pl.BlockSpec((C_out, 1), lambda n: (0, 0)),
            pl.BlockSpec((C_out, 1), lambda n: (0, 0)),
            pl.BlockSpec((C_out, 1), lambda n: (0, 0)),
            pl.BlockSpec((C_out, 1), lambda n: (0, 0)),
        ],
        out_specs=pl.BlockSpec((1, C_out, L_out), lambda n: (n, 0, 0)),
        out_shape=jax.ShapeDtypeStruct((N, C_out, L_out), x.dtype),
        compiler_params=pltpu.CompilerParams(
            dimension_semantics=("parallel",),
            vmem_limit_bytes=vmem_limit,
        ),
    )(y, s1, s2, gamma2, beta2)
    return out


def _reference(x, weight, gamma, beta, padding=1):
    y = lax.conv_general_dilated(
        x, weight, window_strides=(1,), padding=[(padding, padding)],
        dimension_numbers=("NCH", "OIH", "NCH"))
    mean = jnp.mean(y, axis=(0, 2), keepdims=True)
    var = jnp.mean((y - mean) ** 2, axis=(0, 2), keepdims=True)
    return (y - mean) * lax.rsqrt(var + BN_EPS) * gamma.reshape(1, -1, 1) \
        + beta.reshape(1, -1, 1)


if __name__ == "__main__":
    # Small shapes consistent with the module: Conv1d(in_planes=4, planes=8, k=3, pad=1)
    N, C_in, C_out, L, K = 2, 4, 8, 16, 3

    key = jax.random.PRNGKey(0)
    kx, kw = jax.random.split(key)
    x = jax.random.normal(kx, (N, C_in, L), dtype=jnp.float32)
    fan_in = C_in * K
    weight = jax.random.normal(kw, (C_out, C_in, K), dtype=jnp.float32) * (fan_in ** -0.5)
    gamma = jnp.ones((C_out,), dtype=jnp.float32)
    beta = jnp.zeros((C_out,), dtype=jnp.float32)

    out = conv_task_forward(x, weight, gamma, beta)
    out = jax.block_until_ready(out)

    ref = _reference(x, weight, gamma, beta)
    assert out.shape == (N, C_out, L)
    assert jnp.allclose(out, ref, atol=1e-4, rtol=1e-4), "mismatch vs reference"
    print("KERNEL_OK")
</pallas_src>

<mosaic_0001>
module attributes {stable_mosaic.version = 11 : i64} {
  func.func @_conv_stats_kernel(%arg0: i32, %arg1: memref<1x4x18xf32, #tpu.memory_space<vmem>>, %arg2: memref<3x8x4xf32, #tpu.memory_space<vmem>>, %arg3: memref<1x8x16xf32, #tpu.memory_space<vmem>>, %arg4: memref<8x1xf32, #tpu.memory_space<vmem>>, %arg5: memref<8x1xf32, #tpu.memory_space<vmem>>) attributes {dimension_semantics = [#tpu.dimension_semantics<arbitrary>], iteration_bounds = array<i64: 2>, scalar_prefetch = 0 : i64, scratch_operands = 0 : i64, tpu.core_type = #tpu.core_type<tc>, window_params = [{transform_indices = @transform_0, window_bounds = array<i64: 1, 4, 18>}, {pipeline_mode = #tpu.pipeline_mode<synchronous>, transform_indices = @transform_1, window_bounds = array<i64: 3, 8, 4>}, {transform_indices = @transform_2, window_bounds = array<i64: 1, 8, 16>}, {pipeline_mode = #tpu.pipeline_mode<synchronous>, transform_indices = @transform_3, window_bounds = array<i64: 8, 1>}, {pipeline_mode = #tpu.pipeline_mode<synchronous>, transform_indices = @transform_4, window_bounds = array<i64: 8, 1>}]} {
    %c0_i32 = arith.constant 0 : i32
    %0 = arith.cmpi eq, %arg0, %c0_i32 : i32
    %1 = arith.extui %0 : i1 to i32
    %c0_i32_0 = arith.constant 0 : i32
    %2 = arith.cmpi ne, %1, %c0_i32_0 : i32
    scf.if %2 {
      %cst_32 = arith.constant 0.000000e+00 : f32
      %35 = vector.broadcast %cst_32 : f32 to vector<8x1xf32>
      %c0_33 = arith.constant 0 : index
      %c0_34 = arith.constant 0 : index
      %36 = vector.load %arg4[%c0_33, %c0_34] : memref<8x1xf32, #tpu.memory_space<vmem>>, vector<8x1xf32>
      tpu.vector_store %arg4[%c0_33, %c0_34], %35 {strides = array<i32>} : memref<8x1xf32, #tpu.memory_space<vmem>>, vector<8x1xf32>,
      %cst_35 = arith.constant 0.000000e+00 : f32
      %37 = vector.broadcast %cst_35 : f32 to vector<8x1xf32>
      %c0_36 = arith.constant 0 : index
      %c0_37 = arith.constant 0 : index
      %38 = vector.load %arg5[%c0_36, %c0_37] : memref<8x1xf32, #tpu.memory_space<vmem>>, vector<8x1xf32>
      tpu.vector_store %arg5[%c0_36, %c0_37], %37 {strides = array<i32>} : memref<8x1xf32, #tpu.memory_space<vmem>>, vector<8x1xf32>,
    } else {
    }
    %cst = arith.constant 0.000000e+00 : f32
    %3 = vector.broadcast %cst : f32 to vector<8x16xf32>
    %c0 = arith.constant 0 : index
    %c0_1 = arith.constant 0 : index
    %c0_2 = arith.constant 0 : index
    %4 = vector.load %arg1[%c0, %c0_1, %c0_2] : memref<1x4x18xf32, #tpu.memory_space<vmem>>, vector<1x4x16xf32>
    %5 = vector.shape_cast %4 : vector<1x4x16xf32> to vector<4x16xf32>
    %c0_3 = arith.constant 0 : index
    %c0_4 = arith.constant 0 : index
    %c0_5 = arith.constant 0 : index
    %6 = vector.load %arg2[%c0_3, %c0_4, %c0_5] : memref<3x8x4xf32, #tpu.memory_space<vmem>>, vector<1x8x4xf32>
    %7 = vector.shape_cast %6 : vector<1x8x4xf32> to vector<8x4xf32>
    %cst_6 = arith.constant dense<0.000000e+00> : vector<8x16xf32>
    %8 = tpu.matmul %7, %5, %cst_6 {dimension_numbers = #tpu.dot_dimension_numbers<[1], [0], [0], [1], [0, 0, 1, 1], [], []>} : vector<8x4xf32>, vector<4x16xf32>, vector<8x16xf32> -> vector<8x16xf32>
    %9 = arith.addf %3, %8 : vector<8x16xf32>
    %c0_7 = arith.constant 0 : index
    %c0_8 = arith.constant 0 : index
    %c1 = arith.constant 1 : index
    %10 = vector.load %arg1[%c0_7, %c0_8, %c1] : memref<1x4x18xf32, #tpu.memory_space<vmem>>, vector<1x4x16xf32>
    %11 = vector.shape_cast %10 : vector<1x4x16xf32> to vector<4x16xf32>
    %c1_9 = arith.constant 1 : index
    %c0_10 = arith.constant 0 : index
    %c0_11 = arith.constant 0 : index
    %12 = vector.load %arg2[%c1_9, %c0_10, %c0_11] : memref<3x8x4xf32, #tpu.memory_space<vmem>>, vector<1x8x4xf32>
    %13 = vector.shape_cast %12 : vector<1x8x4xf32> to vector<8x4xf32>
    %cst_12 = arith.constant dense<0.000000e+00> : vector<8x16xf32>
    %14 = tpu.matmul %13, %11, %cst_12 {dimension_numbers = #tpu.dot_dimension_numbers<[1], [0], [0], [1], [0, 0, 1, 1], [], []>} : vector<8x4xf32>, vector<4x16xf32>, vector<8x16xf32> -> vector<8x16xf32>
    %15 = arith.addf %9, %14 : vector<8x16xf32>
    %c0_13 = arith.constant 0 : index
    %c0_14 = arith.constant 0 : index
    %c2 = arith.constant 2 : index
    %16 = vector.load %arg1[%c0_13, %c0_14, %c2] : memref<1x4x18xf32, #tpu.memory_space<vmem>>, vector<1x4x16xf32>
    %17 = vector.shape_cast %16 : vector<1x4x16xf32> to vector<4x16xf32>
    %c2_15 = arith.constant 2 : index
    %c0_16 = arith.constant 0 : index
    %c0_17 = arith.constant 0 : index
    %18 = vector.load %arg2[%c2_15, %c0_16, %c0_17] : memref<3x8x4xf32, #tpu.memory_space<vmem>>, vector<1x8x4xf32>
    %19 = vector.shape_cast %18 : vector<1x8x4xf32> to vector<8x4xf32>
    %cst_18 = arith.constant dense<0.000000e+00> : vector<8x16xf32>
    %20 = tpu.matmul %19, %17, %cst_18 {dimension_numbers = #tpu.dot_dimension_numbers<[1], [0], [0], [1], [0, 0, 1, 1], [], []>} : vector<8x4xf32>, vector<4x16xf32>, vector<8x16xf32> -> vector<8x16xf32>
    %21 = arith.addf %15, %20 : vector<8x16xf32>
    %22 = vector.shape_cast %21 : vector<8x16xf32> to vector<1x8x16xf32>
    %c0_19 = arith.constant 0 : index
    %c0_20 = arith.constant 0 : index
    %c0_21 = arith.constant 0 : index
    %23 = vector.load %arg3[%c0_19, %c0_20, %c0_21] : memref<1x8x16xf32, #tpu.memory_space<vmem>>, vector<1x8x16xf32>
    tpu.vector_store %arg3[%c0_19, %c0_20, %c0_21], %22 {strides = array<i32>} : memref<1x8x16xf32, #tpu.memory_space<vmem>>, vector<1x8x16xf32>,
    %c0_22 = arith.constant 0 : index
    %c0_23 = arith.constant 0 : index
    %24 = vector.load %arg4[%c0_22, %c0_23] : memref<8x1xf32, #tpu.memory_space<vmem>>, vector<8x1xf32>
    %cst_24 = arith.constant dense<0.000000e+00> : vector<8xf32>
    %25 = vector.multi_reduction <add>, %21, %cst_24 [1] : vector<8x16xf32> to vector<8xf32>
    %26 = vector.shape_cast %25 : vector<8xf32> to vector<8x1xf32>
    %27 = arith.addf %24, %26 : vector<8x1xf32>
    %c0_25 = arith.constant 0 : index
    %c0_26 = arith.constant 0 : index
    %28 = vector.load %arg4[%c0_25, %c0_26] : memref<8x1xf32, #tpu.memory_space<vmem>>, vector<8x1xf32>
    tpu.vector_store %arg4[%c0_25, %c0_26], %27 {strides = array<i32>} : memref<8x1xf32, #tpu.memory_space<vmem>>, vector<8x1xf32>,
    %c0_27 = arith.constant 0 : index
    %c0_28 = arith.constant 0 : index
    %29 = vector.load %arg5[%c0_27, %c0_28] : memref<8x1xf32, #tpu.memory_space<vmem>>, vector<8x1xf32>
    %30 = arith.mulf %21, %21 : vector<8x16xf32>
    %cst_29 = arith.constant dense<0.000000e+00> : vector<8xf32>
    %31 = vector.multi_reduction <add>, %30, %cst_29 [1] : vector<8x16xf32> to vector<8xf32>
    %32 = vector.shape_cast %31 : vector<8xf32> to vector<8x1xf32>
    %33 = arith.addf %29, %32 : vector<8x1xf32>
    %c0_30 = arith.constant 0 : index
    %c0_31 = arith.constant 0 : index
    %34 = vector.load %arg5[%c0_30, %c0_31] : memref<8x1xf32, #tpu.memory_space<vmem>>, vector<8x1xf32>
    tpu.vector_store %arg5[%c0_30, %c0_31], %33 {strides = array<i32>} : memref<8x1xf32, #tpu.memory_space<vmem>>, vector<8x1xf32>,
    return
  }
  func.func @transform_0(%arg0: i32) -> (i32, i32, i32) {
    %c0_i32 = arith.constant 0 : i32
    %c0_i32_0 = arith.constant 0 : i32
    %c0_i32_1 = arith.constant 0 : i32
    return %arg0, %c0_i32, %c0_i32_0 : i32, i32, i32
  }
  func.func @transform_1(%arg0: i32) -> (i32, i32, i32) {
    %c0_i32 = arith.constant 0 : i32
    %c0_i32_0 = arith.constant 0 : i32
    %c0_i32_1 = arith.constant 0 : i32
    %c0_i32_2 = arith.constant 0 : i32
    return %c0_i32, %c0_i32_0, %c0_i32_1 : i32, i32, i32
  }
  func.func @transform_2(%arg0: i32) -> (i32, i32, i32) {
    %c0_i32 = arith.constant 0 : i32
    %c0_i32_0 = arith.constant 0 : i32
    %c0_i32_1 = arith.constant 0 : i32
    return %arg0, %c0_i32, %c0_i32_0 : i32, i32, i32
  }
  func.func @transform_3(%arg0: i32) -> (i32, i32) {
    %c0_i32 = arith.constant 0 : i32
    %c0_i32_0 = arith.constant 0 : i32
    %c0_i32_1 = arith.constant 0 : i32
    return %c0_i32, %c0_i32_0 : i32, i32
  }
  func.func @transform_4(%arg0: i32) -> (i32, i32) {
    %c0_i32 = arith.constant 0 : i32
    %c0_i32_0 = arith.constant 0 : i32
    %c0_i32_1 = arith.constant 0 : i32
    return %c0_i32, %c0_i32_0 : i32, i32
  }
}

</mosaic_0001>

<llo_original>
// kernel: tpu_custom_call.1
$region0: #{tpu_custom_call.1}
  #allocation0 [shape = 'u32[]', space=smem, size = 0x4, offset = 0x4, fixed_abs, tag = 'smem constant byte address 0x4 - core index']
  #allocation1 [shape = 'u32[144,128]{1,0:T(1,128)}', space=vmem, size = 0x12000, scoped, tag = 'internal scratch']
  %s0 = inlined_call_operand.vmem [shape: f32[2,4,18], index: 0, kind: input, shape index: {}]
  %s1 = inlined_call_operand.vmem [shape: f32[3,8,4], index: 1, kind: input, shape index: {}]
  %s2 = inlined_call_operand.hbm [shape: f32[2,8,16], index: 2, kind: output, shape index: {0}]
  %s3 = inlined_call_operand.vmem [shape: f32[8,1], index: 3, kind: output, shape index: {1}]
  %s4 = inlined_call_operand.vmem [shape: f32[8,1], index: 4, kind: output, shape index: {2}]
  %5 = xla_tuple %s2, %s3, %s4
  %s6 = sld [smem:[#allocation0]]
  $region61: #{tpu_custom_call.1} parent=0
    _
  %s8 = ssub.s32 1, %s6
  %s9 = scalar_select 0, %s8, %s6
  $region1: #{tpu_custom_call.1} parent=0
    #allocation2 [shape = 'u8[8192]{0}', space=vmem, size = 0x2000, scoped, tag = 'output window, operand 0']
    #allocation3 [shape = 's32[2]{0}', space=sflag, size = 0x8, scoped, tag = 'scoped memory for tpu_custom_call.1']
    %10 = vsyncpa [#allocation3], 0
    %s11 = scalar_lea.sflag [#allocation3], 1
    %12 = vsyncpa %s11, 0
    loop: start=0, step=1, limit=4
    $region2: #{tpu_custom_call.1} parent=1 // loop_pre_header
      _
    $region3: #{tpu_custom_call.1} parent=1 // loop_header
      %s14 = sphi 0, %s18
      %p15 = scmp.ge.s32.totalorder %s14, 4
      %s24 = sphi 0, %s26
      %s27 = sphi 0, %s24
      %s28 = sphi 0, %s27
      %s44 = sphi 0, %s28
      %s48 = sphi 0, %s48
      %s50 = sphi 0, %s48
      %s51 = sphi 0, %s50
      %s65 = sphi 0, %s51
      %s71 = sphi 0, %s73
      %s74 = sphi 0, %s71
      %s75 = sphi 0, %s74
      %s91 = sphi 0, %s75
      %s95 = sphi 0, %s95
      %s97 = sphi 0, %s95
      %s98 = sphi 0, %s97
      %s112 = sphi 0, %s98
      %s116 = sphi 0, %s116
      %s118 = sphi 0, %s116
      %s119 = sphi 0, %s118
      %s133 = sphi 0, %s119
    $region4: #{tpu_custom_call.1} parent=1 // loop_header_branch
      %17 = sbr.rel (%p15) target = $region8
    $region5: #{tpu_custom_call.1} parent=1 // loop_body
      %s19 = ssub.s32 %s14, 1
      %s20 = ssub.s32 %s14, 2
      %s21 = sadd.s32 %s14, 1
      %s22 = ssub.s32 %s14, %s21
      %p23 = scmp.eq.s32.totalorder %s22, 0
      %s25 = sadd.s32 %s24, 1
      %s26 = scalar_select %p23, %s24, %s25
      %p29 = pneg %p23
      %p30 = scmp.eq.s32.totalorder %s14, 1
      %p31 = por %p29, %p30
      %p32 = scmp.ne.s32.totalorder %s24, %s27
      %p33 = scmp.eq.s32.totalorder %s14, 0
      %p34 = por %p32, %p33
      %p35 = scmp.ne.s32.totalorder %s24, %s27
      %p36 = scmp.eq.s32.totalorder %s19, 1
      %p37 = por %p35, %p36
      %p38 = scmp.ne.s32.totalorder %s27, %s28
      %p39 = scmp.eq.s32.totalorder %s19, 0
      %p40 = por %p38, %p39
      %p41 = scmp.ne.s32.totalorder %s27, %s28
      %p42 = scmp.eq.s32.totalorder %s20, 1
      %p43 = por %p41, %p42
      %p45 = scmp.ne.s32.totalorder %s28, %s44
      %p46 = scmp.eq.s32.totalorder %s20, 0
      %p47 = por %p45, %p46
      %s49 = sadd.s32 %s48, 1
      %p52 = scmp.eq.s32.totalorder %s14, 1
      %p53 = scmp.ne.s32.totalorder %s48, %s50
      %p54 = scmp.eq.s32.totalorder %s14, 0
      %p55 = por %p53, %p54
      %p56 = scmp.ne.s32.totalorder %s48, %s50
      %p57 = scmp.eq.s32.totalorder %s19, 1
      %p58 = por %p56, %p57
      %p59 = scmp.ne.s32.totalorder %s50, %s51
      %p60 = scmp.eq.s32.totalorder %s19, 0
      %p61 = por %p59, %p60
      %p62 = scmp.ne.s32.totalorder %s50, %s51
      %p63 = scmp.eq.s32.totalorder %s20, 1
      %p64 = por %p62, %p63
      %p66 = scmp.ne.s32.totalorder %s51, %s65
      %p67 = scmp.eq.s32.totalorder %s20, 0
      %p68 = por %p66, %p67
      %s69 = ssub.s32 %s14, %s21
      %p70 = scmp.eq.s32.totalorder %s69, 0
      %s72 = sadd.s32 %s71, 1
      %s73 = scalar_select %p70, %s71, %s72
      %p76 = pneg %p70
      %p77 = scmp.eq.s32.totalorder %s14, 1
      %p78 = por %p76, %p77
      %p79 = scmp.ne.s32.totalorder %s71, %s74
      %p80 = scmp.eq.s32.totalorder %s14, 0
      %p81 = por %p79, %p80
      %p82 = scmp.ne.s32.totalorder %s71, %s74
      %p83 = scmp.eq.s32.totalorder %s19, 1
      %p84 = por %p82, %p83
      %p85 = scmp.ne.s32.totalorder %s74, %s75
      %p86 = scmp.eq.s32.totalorder %s19, 0
      %p87 = por %p85, %p86
      %p88 = scmp.ne.s32.totalorder %s74, %s75
      %p89 = scmp.eq.s32.totalorder %s20, 1
      %p90 = por %p88, %p89
      %p92 = scmp.ne.s32.totalorder %s75, %s91
      %p93 = scmp.eq.s32.totalorder %s20, 0
      %p94 = por %p92, %p93
      %s96 = sadd.s32 %s95, 1
      %p99 = scmp.eq.s32.totalorder %s14, 1
      %p100 = scmp.ne.s32.totalorder %s95, %s97
      %p101 = scmp.eq.s32.totalorder %s14, 0
      %p102 = por %p100, %p101
      %p103 = scmp.ne.s32.totalorder %s95, %s97
      %p104 = scmp.eq.s32.totalorder %s19, 1
      %p105 = por %p103, %p104
      %p106 = scmp.ne.s32.totalorder %s97, %s98
      %p107 = scmp.eq.s32.totalorder %s19, 0
      %p108 = por %p106, %p107
      %p109 = scmp.ne.s32.totalorder %s97, %s98
      %p110 = scmp.eq.s32.totalorder %s20, 1
      %p111 = por %p109, %p110
      %p113 = scmp.ne.s32.totalorder %s98, %s112
      %p114 = scmp.eq.s32.totalorder %s20, 0
      %p115 = por %p113, %p114
      %s117 = sadd.s32 %s116, 1
      %p120 = scmp.eq.s32.totalorder %s14, 1
      %p121 = scmp.ne.s32.totalorder %s116, %s118
      %p122 = scmp.eq.s32.totalorder %s14, 0
      %p123 = por %p121, %p122
      %p124 = scmp.ne.s32.totalorder %s116, %s118
      %p125 = scmp.eq.s32.totalorder %s19, 1
      %p126 = por %p124, %p125
      %p127 = scmp.ne.s32.totalorder %s118, %s119
      %p128 = scmp.eq.s32.totalorder %s19, 0
      %p129 = por %p127, %p128
      %p130 = scmp.ne.s32.totalorder %s118, %s119
      %p131 = scmp.eq.s32.totalorder %s20, 1
      %p132 = por %p130, %p131
      %p134 = scmp.ne.s32.totalorder %s119, %s133
      %p135 = scmp.eq.s32.totalorder %s20, 0
      %p136 = por %p134, %p135
      %p137 = scmp.le.s32.totalorder 1, %s14
      %p138 = scmp.lt.s32.totalorder %s14, 3
      %p139 = pnand %p137, %p138
      %p140 = pneg %p139
      // Predicated region
      $region9: #{tpu_custom_call.1} parent=5 // pred_check
        _
      $region10: #{tpu_custom_call.1} parent=5 // pred_check_branch
        %142 = sbr.rel (%p139) target = $region12
      $region11: #{tpu_custom_call.1} parent=5 // pred_region
        %s143 = ssub.s32 %s14, 1
        // Predicated region
        $region13: #{tpu_custom_call.1} parent=11 // pred_check
          %p144 = pneg %p61
        $region14: #{tpu_custom_call.1} parent=11 // pred_check_branch
          %146 = sbr.rel (%p144) target = $region16
        $region15: #{tpu_custom_call.1} parent=11 // pred_region
          _
        $region16: #{tpu_custom_call.1} parent=11 // pred_fallthru
          _
      $region12: #{tpu_custom_call.1} parent=5 // pred_fallthru
        _
      %p147 = scmp.lt.s32.totalorder %s14, 2
      // Predicated region
      $region17: #{tpu_custom_call.1} parent=5 // pred_check
        %p148 = pneg %p147
      $region18: #{tpu_custom_call.1} parent=5 // pred_check_branch
        %150 = sbr.rel (%p148) target = $region20
      $region19: #{tpu_custom_call.1} parent=5 // pred_region
        // Predicated region
        $region21: #{tpu_custom_call.1} parent=19 // pred_check
          %p151 = pneg %p34
        $region22: #{tpu_custom_call.1} parent=19 // pred_check_branch
          %153 = sbr.rel (%p151) target = $region24
        $region23: #{tpu_custom_call.1} parent=19 // pred_region
          %p154 = scmp.lt.s32.totalorder %s14, 1
          %s155 = scalar_select %p154, %s14, 1
          %s156 = smul.addr %s155, 4
          %s157 = scalar_lea.vmem %s0, %s156
        $region24: #{tpu_custom_call.1} parent=19 // pred_fallthru
          _
      $region20: #{tpu_custom_call.1} parent=5 // pred_fallthru
        _
      %p158 = scmp.le.s32.totalorder 1, %s14
      %p159 = scmp.lt.s32.totalorder %s14, 3
      %p160 = pnand %p158, %p159
      %p161 = pneg %p160
      // Predicated region
      $region25: #{tpu_custom_call.1} parent=5 // pred_check
        _
      $region26: #{tpu_custom_call.1} parent=5 // pred_check_branch
        %163 = sbr.rel (%p160) target = $region28
      $region27: #{tpu_custom_call.1} parent=5 // pred_region
        %s164 = ssub.s32 %s14, 1
        %p165 = scmp.lt.s32.totalorder %s19, 1
        %s166 = scalar_select %p165, %s19, 1
        %s167 = smul.addr %s166, 4
        %s168 = scalar_lea.vmem %s0, %s167
        %p169 = pneg %p40
        %p170 = pneg %p37
        %p171 = pneg %p61
        %p172 = pneg %p58
        %p173 = pneg %p87
        %p174 = pneg %p84
        %s175 = sand.u32 %s74, 1
        %s176 = scalar_lea.sflag [#allocation3], %s175
        %s177 = sand.u32 %s74, 1
        %s178 = smul.addr %s177, 8
        %s179 = scalar_lea.vmem [#allocation2], %s178
        %p180 = pneg %p108
        %p181 = pneg %p105
        %p182 = pneg %p129
        %p183 = pneg %p126
        %p184 = scmp.lt.s32.totalorder %s19, 1
        %s185 = scalar_select %p184, %s19, 1
        %s186 = smul.addr %s185, 4
        %s187 = scalar_lea.vmem %s0, %s186
        %p188 = scmp.eq.s32.totalorder %s19, 0
        // Predicated region
        $region29: #{tpu_custom_call.1} parent=27 // pred_check
          %p189 = pneg %p188
        $region30: #{tpu_custom_call.1} parent=27 // pred_check_branch
          %191 = sbr.rel (%p189) target = $region32
        $region31: #{tpu_custom_call.1} parent=27 // pred_region
          %vm192 = vcmask 7168
          %193 = vst.msk [vmem:[%s3] sm:$0xff] %vm192, 0.0
          %194 = vst.msk [vmem:[%s4] sm:$0xff] %vm192, 0.0
        $region32: #{tpu_custom_call.1} parent=27 // pred_fallthru
          _
        %v195 = vld [vmem:[%s187] sm:$0xf]
        %v196 = vld [vmem:[%s1] sm:$0xff]
        %s197 = scalar_lea.vmem %s1, 8
        %v198 = vld [vmem:[%s197] sm:$0xff]
        %200 = vrot.lane.b32.xlu0 %v195, 127
        %v201 = vpop.permute.xlu0 %200
        %vm202 = vcmask 31744
        %v204 = vsel %vm202, %v198, 0
        %vm206 = vcmask 1043456
        %v207 = vsel %vm206, %v201, 0
        %209 = vmatprep.subr.mxu0 0.0
        %210 = vmatpush1.msra.mxu0 %v207
        %211 = vmatprep.subr.mxu0 0.0
        %212 = vmatpush1.msra.mxu0 0.0
        %213 = vmatprep.subr.mxu0 0.0
        %214 = vmatpush1.msra.mxu0 0.0
        %215 = vmatprep.subr.mxu0 0.0
        %216 = vmatpush1.msra.mxu0 0.0
        %217 = vmatprep.subr.mxu0 0.0
        %218 = vmatpush1.msra.mxu0 0.0
        %219 = vmatprep.subr.mxu0 0.0
        %220 = vmatpush1.msra.mxu0 0.0
        %221 = vmatprep.subr.mxu0 0.0
        %222 = vmatpush1.msra.mxu0 0.0
        %223 = vmatprep.subr.mxu0 0.0
        %224 = vmatpush1.msra.mxu0 0.0
        %225 = vmatprep.subr.mxu0 0.0
        %226 = vmatpush1.msra.mxu0 0.0
        %227 = vmatprep.subr.mxu0 0.0
        %228 = vmatpush1.msra.mxu0 0.0
        %229 = vmatprep.subr.mxu0 0.0
        %230 = vmatpush1.msra.mxu0 0.0
        %231 = vmatprep.subr.mxu0 0.0
        %232 = vmatpush1.msra.mxu0 0.0
        %233 = vmatprep.subr.mxu0 0.0
        %234 = vmatpush1.msra.mxu0 0.0
        %235 = vmatprep.subr.mxu0 0.0
        %236 = vmatpush1.msra.mxu0 0.0
        %237 = vmatprep.subr.mxu0 0.0
        %238 = vmatpush1.msra.mxu0 0.0
        %239 = vmatprep.subr.mxu0 0.0
        %240 = vmatpush1.msra.mxu0 0.0
        %241 = vmatprep.subr.mxu0 0.0
        %242 = vmatpush1.msra.mxu0 0.0
        %243 = vmatprep.subr.mxu0 0.0
        %244 = vmatpush1.msra.mxu0 0.0
        %245 = vmatprep.subr.mxu0 0.0
        %246 = vmatpush1.msra.mxu0 0.0
        %247 = vmatprep.subr.mxu0 0.0
        %248 = vmatpush1.msra.mxu0 0.0
        %249 = vmatprep.subr.mxu0 0.0
        %250 = vmatpush1.msra.mxu0 0.0
        %251 = vmatprep.subr.mxu0 0.0
        %252 = vmatpush1.msra.mxu0 0.0
        %253 = vmatprep.subr.mxu0 0.0
        %254 = vmatpush1.msra.mxu0 0.0
        %255 = vmatprep.subr.mxu0 0.0
        %256 = vmatpush1.msra.mxu0 0.0
        %257 = vmatprep.subr.mxu0 0.0
        %258 = vmatpush1.msra.mxu0 0.0
        %259 = vmatprep.subr.mxu0 0.0
        %260 = vmatpush1.msra.mxu0 0.0
        %261 = vmatprep.subr.mxu0 0.0
        %262 = vmatpush1.msra.mxu0 0.0
        %263 = vmatprep.subr.mxu0 0.0
        %264 = vmatpush1.msra.mxu0 0.0
        %265 = vmatprep.subr.mxu0 0.0
        %266 = vmatpush1.msra.mxu0 0.0
        %267 = vmatprep.subr.mxu0 0.0
        %268 = vmatpush1.msra.mxu0 0.0
        %269 = vmatprep.subr.mxu0 0.0
        %270 = vmatpush1.msra.mxu0 0.0
        %271 = vmatprep.subr.mxu0 0.0
        %272 = vmatpush1.msra.mxu0 0.0
        %273 = vmatprep.mubr.f32.mxu0 0.0
        %274 = vmatmul.mubr.f32.gmra.mrb[0].mxu0 %v204
        %v275 = vpop.f32.mrb[0].mxu0
        %v276 = vadd.f32 0.0, %v275
        %v277 = vpop.f32.mrb[0].mxu0
        %278 = vdwg.mxu0
        %v280 = vsel %vm202, %v196, 0
        %v282 = vsel %vm206, %v195, 0
        %284 = vmatprep.subr.mxu0 0.0
        %285 = vmatpush1.msra.mxu0 %v282
        %286 = vmatprep.subr.mxu0 0.0
        %287 = vmatpush1.msra.mxu0 0.0
        %288 = vmatprep.subr.mxu0 0.0
        %289 = vmatpush1.msra.mxu0 0.0
        %290 = vmatprep.subr.mxu0 0.0
        %291 = vmatpush1.msra.mxu0 0.0
        %292 = vmatprep.subr.mxu0 0.0
        %293 = vmatpush1.msra.mxu0 0.0
        %294 = vmatprep.subr.mxu0 0.0
        %295 = vmatpush1.msra.mxu0 0.0
        %296 = vmatprep.subr.mxu0 0.0
        %297 = vmatpush1.msra.mxu0 0.0
        %298 = vmatprep.subr.mxu0 0.0
        %299 = vmatpush1.msra.mxu0 0.0
        %300 = vmatprep.subr.mxu0 0.0
        %301 = vmatpush1.msra.mxu0 0.0
        %302 = vmatprep.subr.mxu0 0.0
        %303 = vmatpush1.msra.mxu0 0.0
        %304 = vmatprep.subr.mxu0 0.0
        %305 = vmatpush1.msra.mxu0 0.0
        %306 = vmatprep.subr.mxu0 0.0
        %307 = vmatpush1.msra.mxu0 0.0
        %308 = vmatprep.subr.mxu0 0.0
        %309 = vmatpush1.msra.mxu0 0.0
        %310 = vmatprep.subr.mxu0 0.0
        %311 = vmatpush1.msra.mxu0 0.0
        %312 = vmatprep.subr.mxu0 0.0
        %313 = vmatpush1.msra.mxu0 0.0
        %314 = vmatprep.subr.mxu0 0.0
        %315 = vmatpush1.msra.mxu0 0.0
        %316 = vmatprep.subr.mxu0 0.0
        %317 = vmatpush1.msra.mxu0 0.0
        %318 = vmatprep.subr.mxu0 0.0
        %319 = vmatpush1.msra.mxu0 0.0
        %320 = vmatprep.subr.mxu0 0.0
        %321 = vmatpush1.msra.mxu0 0.0
        %322 = vmatprep.subr.mxu0 0.0
        %323 = vmatpush1.msra.mxu0 0.0
        %324 = vmatprep.subr.mxu0 0.0
        %325 = vmatpush1.msra.mxu0 0.0
        %326 = vmatprep.subr.mxu0 0.0
        %327 = vmatpush1.msra.mxu0 0.0
        %328 = vmatprep.subr.mxu0 0.0
        %329 = vmatpush1.msra.mxu0 0.0
        %330 = vmatprep.subr.mxu0 0.0
        %331 = vmatpush1.msra.mxu0 0.0
        %332 = vmatprep.subr.mxu0 0.0
        %333 = vmatpush1.msra.mxu0 0.0
        %334 = vmatprep.subr.mxu0 0.0
        %335 = vmatpush1.msra.mxu0 0.0
        %336 = vmatprep.subr.mxu0 0.0
        %337 = vmatpush1.msra.mxu0 0.0
        %338 = vmatprep.subr.mxu0 0.0
        %339 = vmatpush1.msra.mxu0 0.0
        %340 = vmatprep.subr.mxu0 0.0
        %341 = vmatpush1.msra.mxu0 0.0
        %342 = vmatprep.subr.mxu0 0.0
        %343 = vmatpush1.msra.mxu0 0.0
        %344 = vmatprep.subr.mxu0 0.0
        %345 = vmatpush1.msra.mxu0 0.0
        %346 = vmatprep.subr.mxu0 0.0
        %347 = vmatpush1.msra.mxu0 0.0
        %348 = vmatprep.mubr.f32.mxu0 0.0
        %349 = vmatmul.mubr.f32.gmra.mrb[0].mxu0 %v280
        %v350 = vpop.f32.mrb[0].mxu0
        %v351 = vadd.f32 %v276, %v350
        %v352 = vpop.f32.mrb[0].mxu0
        %353 = vdwg.mxu0
        %s354 = scalar_lea.vmem %s1, 16
        %v355 = vld [vmem:[%s354] sm:$0xff]
        %356 = vrot.lane.b32.xlu0 %v195, 126
        %v357 = vpop.permute.xlu0 %356
        %v359 = vsel %vm202, %v355, 0
        %v361 = vsel %vm206, %v357, 0
        %363 = vmatprep.subr.mxu0 0.0
        %364 = vmatpush1.msra.mxu0 %v361
        %365 = vmatprep.subr.mxu0 0.0
        %366 = vmatpush1.msra.mxu0 0.0
        %367 = vmatprep.subr.mxu0 0.0
        %368 = vmatpush1.msra.mxu0 0.0
        %369 = vmatprep.subr.mxu0 0.0
        %370 = vmatpush1.msra.mxu0 0.0
        %371 = vmatprep.subr.mxu0 0.0
        %372 = vmatpush1.msra.mxu0 0.0
        %373 = vmatprep.subr.mxu0 0.0
        %374 = vmatpush1.msra.mxu0 0.0
        %375 = vmatprep.subr.mxu0 0.0
        %376 = vmatpush1.msra.mxu0 0.0
        %377 = vmatprep.subr.mxu0 0.0
        %378 = vmatpush1.msra.mxu0 0.0
        %379 = vmatprep.subr.mxu0 0.0
        %380 = vmatpush1.msra.mxu0 0.0
        %381 = vmatprep.subr.mxu0 0.0
        %382 = vmatpush1.msra.mxu0 0.0
        %383 = vmatprep.subr.mxu0 0.0
        %384 = vmatpush1.msra.mxu0 0.0
        %385 = vmatprep.subr.mxu0 0.0
        %386 = vmatpush1.msra.mxu0 0.0
        %387 = vmatprep.subr.mxu0 0.0
        %388 = vmatpush1.msra.mxu0 0.0
        %389 = vmatprep.subr.mxu0 0.0
        %390 = vmatpush1.msra.mxu0 0.0
        %391 = vmatprep.subr.mxu0 0.0
        %392 = vmatpush1.msra.mxu0 0.0
        %393 = vmatprep.subr.mxu0 0.0
        %394 = vmatpush1.msra.mxu0 0.0
        %395 = vmatprep.subr.mxu0 0.0
        %396 = vmatpush1.msra.mxu0 0.0
        %397 = vmatprep.subr.mxu0 0.0
        %398 = vmatpush1.msra.mxu0 0.0
        %399 = vmatprep.subr.mxu0 0.0
        %400 = vmatpush1.msra.mxu0 0.0
        %401 = vmatprep.subr.mxu0 0.0
        %402 = vmatpush1.msra.mxu0 0.0
        %403 = vmatprep.subr.mxu0 0.0
        %404 = vmatpush1.msra.mxu0 0.0
        %405 = vmatprep.subr.mxu0 0.0
        %406 = vmatpush1.msra.mxu0 0.0
        %407 = vmatprep.subr.mxu0 0.0
        %408 = vmatpush1.msra.mxu0 0.0
        %409 = vmatprep.subr.mxu0 0.0
        %410 = vmatpush1.msra.mxu0 0.0
        %411 = vmatprep.subr.mxu0 0.0
        %412 = vmatpush1.msra.mxu0 0.0
        %413 = vmatprep.subr.mxu0 0.0
        %414 = vmatpush1.msra.mxu0 0.0
        %415 = vmatprep.subr.mxu0 0.0
        %416 = vmatpush1.msra.mxu0 0.0
        %417 = vmatprep.subr.mxu0 0.0
        %418 = vmatpush1.msra.mxu0 0.0
        %419 = vmatprep.subr.mxu0 0.0
        %420 = vmatpush1.msra.mxu0 0.0
        %421 = vmatprep.subr.mxu0 0.0
        %422 = vmatpush1.msra.mxu0 0.0
        %423 = vmatprep.subr.mxu0 0.0
        %424 = vmatpush1.msra.mxu0 0.0
        %425 = vmatprep.subr.mxu0 0.0
        %426 = vmatpush1.msra.mxu0 0.0
        %427 = vmatprep.mubr.f32.mxu0 0.0
        %428 = vmatmul.mubr.f32.gmra.mrb[0].mxu0 %v359
        %v429 = vpop.f32.mrb[0].mxu0
        %v430 = vadd.f32 0.0, %v429
        %v431 = vpop.f32.mrb[0].mxu0
        %432 = vdwg.mxu0
        %v433 = vadd.f32 %v351, %v430
        %vm434 = vcmask 130048
        %435 = vst.msk [vmem:[%s179] sm:$0xff] %vm434, %v433
        %v436 = vld [vmem:[%s3] sm:$0xff]
        %v437 = vsel %vm434, %v433, 0.0
        %438 = vadd.xlane.f32.xlu0 %v437
        %v439 = vpop.xlane.xlu0 %438
        %v440 = vadd.f32 %v436, %v439
        %vm441 = vcmask 7168
        %442 = vst.msk [vmem:[%s3] sm:$0xff] %vm441, %v440
        %v443 = vld [vmem:[%s4] sm:$0xff]
        %v444 = vmul.f32 %v433, %v433
        %v445 = vsel %vm434, %v444, 0.0
        %446 = vadd.xlane.f32.xlu0 %v445
        %v447 = vpop.xlane.xlu0 %446
        %v448 = vadd.f32 %v443, %v447
        %449 = vst.msk [vmem:[%s4] sm:$0xff] %vm441, %v448
        %s450 = sand.u32 %s74, 1
        %s451 = scalar_lea.sflag [#allocation3], %s450
        %s452 = sand.u32 %s74, 1
        %s453 = smul.addr %s452, 8
        %s454 = scalar_lea.vmem [#allocation2], %s453
        // Predicated region
        $region33: #{tpu_custom_call.1} parent=27 // pred_check
          %p455 = pneg %p84
        $region34: #{tpu_custom_call.1} parent=27 // pred_check_branch
          %457 = sbr.rel (%p455) target = $region36
        $region35: #{tpu_custom_call.1} parent=27 // pred_region
          %s459 = ssub.s32 128, 128
          %460 = vsyncadd %s451, %s459
          %s461 = smul.addr %s19, 128
          %s462 = scalar_lea.hbm %s2, %s461
          %s464 = sshll.u32 %s454, 4
          %s465 = int_to_ptr.vmem [resolvable:$true] %s464
          %467 = dma.vmem_to_hbm [thread:$0]  %s465, 128, %s462, %s451
        $region36: #{tpu_custom_call.1} parent=27 // pred_fallthru
          _
        // Predicated region
        $region37: #{tpu_custom_call.1} parent=27 // pred_check
          %p468 = pneg %p105
        $region38: #{tpu_custom_call.1} parent=27 // pred_check_branch
          %470 = sbr.rel (%p468) target = $region40
        $region39: #{tpu_custom_call.1} parent=27 // pred_region
          _
        $region40: #{tpu_custom_call.1} parent=27 // pred_fallthru
          _
        // Predicated region
        $region41: #{tpu_custom_call.1} parent=27 // pred_check
          %p471 = pneg %p126
        $region42: #{tpu_custom_call.1} parent=27 // pred_check_branch
          %473 = sbr.rel (%p471) target = $region44
        $region43: #{tpu_custom_call.1} parent=27 // pred_region
          _
        $region44: #{tpu_custom_call.1} parent=27 // pred_fallthru
          _
        // Predicated region
        $region45: #{tpu_custom_call.1} parent=27 // pred_check
          %p474 = pneg %p105
        $region46: #{tpu_custom_call.1} parent=27 // pred_check_branch
          %476 = sbr.rel (%p474) target = $region48
        $region47: #{tpu_custom_call.1} parent=27 // pred_region
          _
        $region48: #{tpu_custom_call.1} parent=27 // pred_fallthru
          _
        // Predicated region
        $region49: #{tpu_custom_call.1} parent=27 // pred_check
          %p477 = pneg %p126
        $region50: #{tpu_custom_call.1} parent=27 // pred_check_branch
          %479 = sbr.rel (%p477) target = $region52
        $region51: #{tpu_custom_call.1} parent=27 // pred_region
          _
        $region52: #{tpu_custom_call.1} parent=27 // pred_fallthru
          _
      $region28: #{tpu_custom_call.1} parent=5 // pred_fallthru
        _
      %p480 = scmp.le.s32.totalorder 2, %s14
      // Predicated region
      $region53: #{tpu_custom_call.1} parent=5 // pred_check
        %p481 = pneg %p480
      $region54: #{tpu_custom_call.1} parent=5 // pred_check_branch
        %483 = sbr.rel (%p481) target = $region56
      $region55: #{tpu_custom_call.1} parent=5 // pred_region
        %s484 = ssub.s32 %s14, 2
        // Predicated region
        $region57: #{tpu_custom_call.1} parent=55 // pred_check
          %p485 = pneg %p90
        $region58: #{tpu_custom_call.1} parent=55 // pred_check_branch
          %487 = sbr.rel (%p485) target = $region60
        $region59: #{tpu_custom_call.1} parent=55 // pred_region
          %s488 = sand.u32 %s75, 1
          %s489 = scalar_lea.sflag [#allocation3], %s488
          %s490 = sand.u32 %s75, 1
          %s491 = smul.addr %s490, 8
          %s492 = scalar_lea.vmem [#allocation2], %s491
          %493 = dma.done %s489, 128
        $region60: #{tpu_custom_call.1} parent=55 // pred_fallthru
          _
      $region56: #{tpu_custom_call.1} parent=5 // pred_fallthru
        _
    $region6: #{tpu_custom_call.1} parent=1 // loop_footer
      %s18 = sadd.s32 1, %s14
    $region7: #{tpu_custom_call.1} parent=1 // loop_footer_branch
      %13 = sbr.rel target = $region3
    $region8: #{tpu_custom_call.1} parent=1 // loop_exit
      _
    %494 = vsyncpa [#allocation3], 1
    %s495 = scalar_lea.sflag [#allocation3], 1
    %496 = vsyncpa %s495, 1

</llo_original>
